<compile_context>
chip_gen: v6e
topology: v6e:2x2x1
jax: 0.10.0
libtpu: 0.0.40
codegen_flags: <defaults>
</compile_context>

<pallas_src>
import numpy as np
import jax
import jax.numpy as jnp
from jax.experimental import pallas as pl
from jax.experimental.pallas import tpu as pltpu


def _cpc_mse_kernel(z_ref, p_ref, out_ref):
    # z_ref, p_ref: (Kb, B, D) block of selected-Z / predicted-Z for Kb timesteps
    # out_ref:      (Kb, 1, 1) per-k partial sums of squared error
    diff = p_ref[...].astype(jnp.float32) - z_ref[...].astype(jnp.float32)
    sq = diff * diff
    # Reduce lanes (D) then sublanes (B); keep the per-k leading axis.
    per_k = jnp.sum(jnp.sum(sq, axis=2, keepdims=True), axis=1, keepdims=True)
    out_ref[...] = per_k


def _pick_kb(num_k, b, d, itemsize, budget_bytes=8 * 1024 * 1024):
    """Largest divisor of num_k whose double-buffered input blocks fit the budget."""
    per_k_bytes = 2 * b * d * itemsize * 2  # two inputs, x2 for double buffering
    kb = max(1, min(num_k, budget_bytes // max(per_k_bytes, 1)))
    while num_k % kb:
        kb -= 1
    return int(kb)


def cpc_mse_loss(Z_future_timesteps, predicted_future_Z,
                 future_predicted_timesteps=12):
    """JAX/Pallas equivalent of CPC_mse_loss.forward.

    Z_future_timesteps:  [T, B, D] encodings of future timesteps
    predicted_future_Z:  [Kp, B, D] predicted future embeddings (Kp >= num_k)
    future_predicted_timesteps: int or list of ints (1-based timestep offsets)
    """
    if isinstance(future_predicted_timesteps, int):
        timesteps = np.arange(1, future_predicted_timesteps + 1)
    else:
        timesteps = np.asarray(list(future_predicted_timesteps))
    num_k = int(len(timesteps))
    assert predicted_future_Z.shape[0] >= num_k, (
        "predicted_future_Z must provide at least len(future_predicted_timesteps) rows")

    # Glue (plain JAX): line both inputs up along the same leading axis so the
    # kernel walks them with one sequential block index.
    if np.array_equal(timesteps, np.arange(1, num_k + 1)):
        z_sel = Z_future_timesteps[:num_k]           # contiguous -> cheap slice
    else:
        z_sel = jnp.take(Z_future_timesteps,
                         jnp.asarray(timesteps - 1, dtype=jnp.int32), axis=0)
    p_sel = predicted_future_Z[:num_k]

    _, B, D = z_sel.shape
    itemsize = np.dtype(z_sel.dtype).itemsize
    kb = _pick_kb(num_k, B, D, itemsize)
    grid = (num_k // kb,)

    partials = pl.pallas_call(
        _cpc_mse_kernel,
        out_shape=jax.ShapeDtypeStruct((num_k, 1, 1), jnp.float32),
        grid_spec=pltpu.PrefetchScalarGridSpec(
            num_scalar_prefetch=0,
            grid=grid,
            in_specs=[
                pl.BlockSpec((kb, B, D), lambda g: (g, 0, 0)),
                pl.BlockSpec((kb, B, D), lambda g: (g, 0, 0)),
            ],
            out_specs=pl.BlockSpec((kb, 1, 1), lambda g: (g, 0, 0)),
        ),
        compiler_params=pltpu.CompilerParams(
            dimension_semantics=("parallel",)),
    )(z_sel, p_sel)

    # Tiny final reduce + normalization in the wrapper (one XLA reduce over K
    # scalars): mse_k = sum_sq_k / (B*D);  loss = mean_k mse_k.
    denom = jnp.float32(B) * jnp.float32(D) * jnp.float32(num_k)
    return jnp.sum(partials) / denom


def _reference_cpc_mse_loss(Z, P, future_predicted_timesteps):
    """Pure-JAX reference mirroring the PyTorch forward exactly."""
    if isinstance(future_predicted_timesteps, int):
        timesteps = list(range(1, future_predicted_timesteps + 1))
    else:
        timesteps = list(future_predicted_timesteps)
    loss = jnp.float32(0.0)
    for i, k in enumerate(timesteps):
        diff = P[i].astype(jnp.float32) - Z[k - 1].astype(jnp.float32)
        loss = loss + jnp.mean(diff * diff)
    return loss / jnp.float32(len(timesteps))


if __name__ == "__main__":
    key = jax.random.PRNGKey(0)

    # Case 1: default contiguous timesteps (int), K=4, batch=8, embed dim=32.
    K, B, D = 4, 8, 32
    k1, k2, k3, k4 = jax.random.split(key, 4)
    Z1 = jax.random.normal(k1, (K, B, D), dtype=jnp.float32)
    P1 = jax.random.normal(k2, (K, B, D), dtype=jnp.float32)
    loss1 = jax.block_until_ready(cpc_mse_loss(Z1, P1, future_predicted_timesteps=K))
    ref1 = jax.block_until_ready(_reference_cpc_mse_loss(Z1, P1, K))
    assert np.allclose(np.asarray(loss1), np.asarray(ref1), rtol=1e-5, atol=1e-5), (
        f"mismatch (contiguous): kernel={loss1} ref={ref1}")

    # Case 2: explicit (non-contiguous) timestep list.
    T, Kp = 6, 5
    timesteps = [2, 5, 6]
    Z2 = jax.random.normal(k3, (T, B, D), dtype=jnp.float32)
    P2 = jax.random.normal(k4, (Kp, B, D), dtype=jnp.float32)
    loss2 = jax.block_until_ready(
        cpc_mse_loss(Z2, P2, future_predicted_timesteps=timesteps))
    ref2 = jax.block_until_ready(_reference_cpc_mse_loss(Z2, P2, timesteps))
    assert np.allclose(np.asarray(loss2), np.asarray(ref2), rtol=1e-5, atol=1e-5), (
        f"mismatch (list): kernel={loss2} ref={ref2}")

    print("KERNEL_OK")
</pallas_src>

<mosaic_0001>
module attributes {stable_mosaic.version = 11 : i64} {
  func.func @_cpc_mse_kernel(%arg0: i32, %arg1: memref<4x8x32xf32, #tpu.memory_space<vmem>>, %arg2: memref<4x8x32xf32, #tpu.memory_space<vmem>>, %arg3: memref<4x1x1xf32, #tpu.memory_space<vmem>>) attributes {dimension_semantics = [#tpu.dimension_semantics<parallel>], iteration_bounds = array<i64: 1>, scalar_prefetch = 0 : i64, scratch_operands = 0 : i64, tpu.core_type = #tpu.core_type<tc>, window_params = [{transform_indices = @transform_0, window_bounds = array<i64: 4, 8, 32>}, {transform_indices = @transform_1, window_bounds = array<i64: 4, 8, 32>}, {transform_indices = @transform_2, window_bounds = array<i64: 4, 1, 1>}]} {
    %c0 = arith.constant 0 : index
    %c0_0 = arith.constant 0 : index
    %c0_1 = arith.constant 0 : index
    %0 = vector.load %arg2[%c0, %c0_0, %c0_1] : memref<4x8x32xf32, #tpu.memory_space<vmem>>, vector<4x8x32xf32>
    %c0_2 = arith.constant 0 : index
    %c0_3 = arith.constant 0 : index
    %c0_4 = arith.constant 0 : index
    %1 = vector.load %arg1[%c0_2, %c0_3, %c0_4] : memref<4x8x32xf32, #tpu.memory_space<vmem>>, vector<4x8x32xf32>
    %2 = arith.subf %0, %1 : vector<4x8x32xf32>
    %3 = arith.mulf %2, %2 : vector<4x8x32xf32>
    %cst = arith.constant dense<0.000000e+00> : vector<4x8xf32>
    %4 = vector.multi_reduction <add>, %3, %cst [2] : vector<4x8x32xf32> to vector<4x8xf32>
    %5 = vector.shape_cast %4 : vector<4x8xf32> to vector<4x8x1xf32>
    %cst_5 = arith.constant dense<0.000000e+00> : vector<4x1xf32>
    %6 = vector.multi_reduction <add>, %5, %cst_5 [1] : vector<4x8x1xf32> to vector<4x1xf32>
    %7 = vector.shape_cast %6 : vector<4x1xf32> to vector<4x1x1xf32>
    %c0_6 = arith.constant 0 : index
    %c0_7 = arith.constant 0 : index
    %c0_8 = arith.constant 0 : index
    %8 = vector.load %arg3[%c0_6, %c0_7, %c0_8] : memref<4x1x1xf32, #tpu.memory_space<vmem>>, vector<4x1x1xf32>
    tpu.vector_store %arg3[%c0_6, %c0_7, %c0_8], %7 {strides = array<i32>} : memref<4x1x1xf32, #tpu.memory_space<vmem>>, vector<4x1x1xf32>,
    return
  }
  func.func @transform_0(%arg0: i32) -> (i32, i32, i32) {
    %c0_i32 = arith.constant 0 : i32
    %c0_i32_0 = arith.constant 0 : i32
    %c0_i32_1 = arith.constant 0 : i32
    return %arg0, %c0_i32, %c0_i32_0 : i32, i32, i32
  }
  func.func @transform_1(%arg0: i32) -> (i32, i32, i32) {
    %c0_i32 = arith.constant 0 : i32
    %c0_i32_0 = arith.constant 0 : i32
    %c0_i32_1 = arith.constant 0 : i32
    return %arg0, %c0_i32, %c0_i32_0 : i32, i32, i32
  }
  func.func @transform_2(%arg0: i32) -> (i32, i32, i32) {
    %c0_i32 = arith.constant 0 : i32
    %c0_i32_0 = arith.constant 0 : i32
    %c0_i32_1 = arith.constant 0 : i32
    return %arg0, %c0_i32, %c0_i32_0 : i32, i32, i32
  }
}

</mosaic_0001>

<llo_original>
// kernel: tpu_custom_call.1
$region0: #{tpu_custom_call.1}
  #allocation0 [shape = 'u32[]', space=smem, size = 0x4, offset = 0x4, fixed_abs, tag = 'smem constant byte address 0x4 - core index']
  #allocation1 [shape = 'u32[144,128]{1,0:T(1,128)}', space=vmem, size = 0x12000, scoped, tag = 'internal scratch']
  %s0 = inlined_call_operand.hbm [shape: f32[4,8,32], index: 0, kind: input, shape index: {}]
  %s1 = inlined_call_operand.hbm [shape: f32[4,8,32], index: 1, kind: input, shape index: {}]
  %s2 = inlined_call_operand.vmem [shape: f32[4,1,1], index: 2, kind: output, shape index: {}]
  %s3 = sld [smem:[#allocation0]]
  $region26: #{tpu_custom_call.1} parent=0
    _
  %s5 = ssub.s32 1, %s3
  %s6 = scalar_select 0, %s5, %s3
  $region1: #{tpu_custom_call.1} parent=0
    #allocation2 [shape = 'u8[16384]{0}', space=vmem, size = 0x4000, scoped, tag = 'input window, operand 0, single buffered']
    #allocation3 [shape = 's32[1]{0}', space=sflag, size = 0x4, scoped, tag = 'scoped memory for tpu_custom_call.1']
    #allocation4 [shape = 'u8[16384]{0}', space=vmem, size = 0x4000, scoped, tag = 'input window, operand 1, single buffered']
    #allocation5 [shape = 's32[1]{0}', space=sflag, size = 0x4, scoped, tag = 'scoped memory for tpu_custom_call.1']
    %7 = vsyncpa [#allocation3], 0
    %8 = vsyncpa [#allocation5], 0
    // Predicated region
    $region2: #{tpu_custom_call.1} parent=1 // pred_check
      _
    $region3: #{tpu_custom_call.1} parent=1 // pred_check_branch
      %10 = sbr.rel (0) target = $region5
    $region4: #{tpu_custom_call.1} parent=1 // pred_region
      %s12 = ssub.s32 512, 512
      %13 = vsyncadd [#allocation3], %s12
      %s14 = sshll.u32 [#allocation2], 4
      %s15 = int_to_ptr.vmem [resolvable:$true] %s14
      %20 = dma.hbm_to_vmem [thread:$0]  %s0, 512, %s15, [#allocation3], 128, 128, 8
    $region5: #{tpu_custom_call.1} parent=1 // pred_fallthru
      _
    // Predicated region
    $region6: #{tpu_custom_call.1} parent=1 // pred_check
      _
    $region7: #{tpu_custom_call.1} parent=1 // pred_check_branch
      %22 = sbr.rel (0) target = $region9
    $region8: #{tpu_custom_call.1} parent=1 // pred_region
      %s24 = ssub.s32 512, 512
      %25 = vsyncadd [#allocation5], %s24
      %s26 = sshll.u32 [#allocation4], 4
      %s27 = int_to_ptr.vmem [resolvable:$true] %s26
      %32 = dma.hbm_to_vmem [thread:$0]  %s1, 512, %s27, [#allocation5], 128, 128, 8
    $region9: #{tpu_custom_call.1} parent=1 // pred_fallthru
      _
    // Predicated region
    $region10: #{tpu_custom_call.1} parent=1 // pred_check
      _
    $region11: #{tpu_custom_call.1} parent=1 // pred_check_branch
      %34 = sbr.rel (0) target = $region13
    $region12: #{tpu_custom_call.1} parent=1 // pred_region
      %35 = dma.done [#allocation3], 512
    $region13: #{tpu_custom_call.1} parent=1 // pred_fallthru
      _
    // Predicated region
    $region14: #{tpu_custom_call.1} parent=1 // pred_check
      _
    $region15: #{tpu_custom_call.1} parent=1 // pred_check_branch
      %37 = sbr.rel (0) target = $region17
    $region16: #{tpu_custom_call.1} parent=1 // pred_region
      %38 = dma.done [#allocation5], 512
    $region17: #{tpu_custom_call.1} parent=1 // pred_fallthru
      _
    %v39 = vld [vmem:[#allocation4] sm:$0xff]
    %v40 = vld [vmem:[#allocation4 + $0x8] sm:$0xff]
    %v41 = vld [vmem:[#allocation4 + $0x10] sm:$0xff]
    %v42 = vld [vmem:[#allocation4 + $0x18] sm:$0xff]
    %v43 = vld [vmem:[#allocation2] sm:$0xff]
    %v44 = vld [vmem:[#allocation2 + $0x8] sm:$0xff]
    %v45 = vld [vmem:[#allocation2 + $0x10] sm:$0xff]
    %v46 = vld [vmem:[#allocation2 + $0x18] sm:$0xff]
    %v47 = vsub.f32 %v39, %v43
    %v48 = vsub.f32 %v40, %v44
    %v49 = vsub.f32 %v41, %v45
    %v50 = vsub.f32 %v42, %v46
    %v51 = vmul.f32 %v47, %v47
    %v52 = vmul.f32 %v48, %v48
    %v53 = vmul.f32 %v49, %v49
    %v54 = vmul.f32 %v50, %v50
    %vm55 = vcmask 261120
    %v56 = vsel %vm55, %v51, 0.0
    %57 = vadd.xlane.f32.xlu0 %v56
    %v58 = vpop.xlane.xlu0 %57
    %v59 = vsel %vm55, %v52, 0.0
    %60 = vadd.xlane.f32.xlu0 %v59
    %v61 = vpop.xlane.xlu0 %60
    %v62 = vsel %vm55, %v53, 0.0
    %63 = vadd.xlane.f32.xlu0 %v62
    %v64 = vpop.xlane.xlu0 %63
    %v65 = vsel %vm55, %v54, 0.0
    %66 = vadd.xlane.f32.xlu0 %v65
    %v67 = vpop.xlane.xlu0 %66
    %v68 = vrot.slane %v58, 4
    %v69 = vadd.f32 %v58, %v68
    %v70 = vrot.slane %v69, 2
    %v71 = vadd.f32 %v69, %v70
    %v72 = vrot.slane %v71, 1
    %v73 = vadd.f32 %v71, %v72
    %v74 = vrot.slane %v61, 4
    %v75 = vadd.f32 %v61, %v74
    %v76 = vrot.slane %v75, 2
    %v77 = vadd.f32 %v75, %v76
    %v78 = vrot.slane %v77, 1
    %v79 = vadd.f32 %v77, %v78
    %v80 = vrot.slane %v64, 4
    %v81 = vadd.f32 %v64, %v80
    %v82 = vrot.slane %v81, 2
    %v83 = vadd.f32 %v81, %v82
    %v84 = vrot.slane %v83, 1
    %v85 = vadd.f32 %v83, %v84
    %v86 = vrot.slane %v67, 4
    %v87 = vadd.f32 %v67, %v86
    %v88 = vrot.slane %v87, 2
    %v89 = vadd.f32 %v87, %v88
    %v90 = vrot.slane %v89, 1
    %v91 = vadd.f32 %v89, %v90
    %vm92 = vcmask 0
    %93 = vst.msk [vmem:[%s2] sm:$0x1] %vm92, %v73
    %94 = vst.msk [vmem:[%s2 + $0x1] sm:$0x1] %vm92, %v79
    %95 = vst.msk [vmem:[%s2 + $0x2] sm:$0x1] %vm92, %v85
    %96 = vst.msk [vmem:[%s2 + $0x3] sm:$0x1] %vm92, %v91
    // Predicated region
    $region18: #{tpu_custom_call.1} parent=1 // pred_check
      _
    $region19: #{tpu_custom_call.1} parent=1 // pred_check_branch
      %98 = sbr.rel (0) target = $region21
    $region20: #{tpu_custom_call.1} parent=1 // pred_region
      _
    $region21: #{tpu_custom_call.1} parent=1 // pred_fallthru
      _
    // Predicated region
    $region22: #{tpu_custom_call.1} parent=1 // pred_check
      _
    $region23: #{tpu_custom_call.1} parent=1 // pred_check_branch
      %100 = sbr.rel (0) target = $region25
    $region24: #{tpu_custom_call.1} parent=1 // pred_region
      _
    $region25: #{tpu_custom_call.1} parent=1 // pred_fallthru
      _
    %101 = vsyncpa [#allocation3], 1
    %102 = vsyncpa [#allocation5], 1

</llo_original>
